<compile_context>
chip_gen: v7x
topology: tpu7x:2x2x1
jax: 0.10.0
libtpu: 0.0.40
codegen_flags: <defaults>
</compile_context>

<pallas_src>
import functools

import jax
import jax.numpy as jnp
from jax import lax
from jax.experimental import pallas as pl
from jax.experimental.pallas import tpu as pltpu


# -----------------------------------------------------------------------------
# Pallas kernel: full forward pass (LSTM recurrence + Linear + Tanh head)
# -----------------------------------------------------------------------------
def _lstm_net_kernel(x_ref, wih_ref, whh_ref, b_ref, wlin_ref, blin_ref,
                     y_ref, h_out_ref, c_out_ref, *, T, B):
    H = whh_ref.shape[0]
    D = x_ref.shape[-1]

    # ---- Hoisted input projection: ONE MXU call for all timesteps ----------
    # x_ref is the untouched batch_first block (B, T, D); collapsing the
    # leading dims is layout-free (inner collapsed dim == 8 sublanes).
    x2d = x_ref[...].reshape(B * T, D)                       # row = b*T + t
    gx = (jnp.dot(x2d, wih_ref[...], preferred_element_type=jnp.float32)
          + b_ref[...]).reshape(B, T, 4 * H)                 # (B, T, 4H), in vregs

    # ---- Hoisted gate-activation constants (no broadcast_in_dim in loop) ---
    # PyTorch gate order along lanes: i, f, g, o.  tanh(x) = 2*sigmoid(2x) - 1,
    # so pre-scaling the g lanes by 2 lets one sigmoid cover all four gates.
    lane = lax.broadcasted_iota(jnp.int32, (B, 4 * H), 1)
    g_mask = (lane >= 2 * H) & (lane < 3 * H)
    gate_scale = jnp.where(g_mask, 2.0, 1.0).astype(jnp.float32)   # x2 on g lanes
    gate_shift = jnp.where(g_mask, -1.0, 0.0).astype(jnp.float32)  # -1 on g lanes

    whh = whh_ref[...]                                       # (H, 4H), loaded once

    # h_0 = c_0 = 0 (PyTorch default when no initial state is given).
    # State carried as vreg values; no VMEM scratch read-modify-write.
    h = jnp.zeros((B, H), jnp.float32)
    c = jnp.zeros((B, H), jnp.float32)

    # Fully-unrolled static time loop (T is a Python int at trace time).
    for t in range(T):
        gates = (jnp.dot(h, whh, preferred_element_type=jnp.float32)
                 + gx[:, t, :])                              # (B, 4H)
        sig = jax.nn.sigmoid(gates * gate_scale)             # single EUP launch
        act = sig * gate_scale + gate_shift                  # i,f,o: sigmoid ; g: tanh
        i_g = act[:, 0 * H:1 * H]
        f_g = act[:, 1 * H:2 * H]
        g_g = act[:, 2 * H:3 * H]
        o_g = act[:, 3 * H:4 * H]
        c = f_g * c + i_g * g_g
        h = o_g * jnp.tanh(c)

    # Dropout (eval) is identity; Linear + Tanh are per-position, so applying
    # them to the final hidden state is exactly out[:, -1, :] of the sequence.
    y = jnp.tanh(jnp.dot(h, wlin_ref[...], preferred_element_type=jnp.float32)
                 + blin_ref[...])

    # One store per output ref (no zeros-init / partial read-modify-write).
    y_ref[...] = y
    h_out_ref[...] = h
    c_out_ref[...] = c


@jax.jit
def customized_network_forward(x_btd, w_ih_t, w_hh_t, b_gates, w_lin_t, b_lin):
    """x_btd: (B, T, D) float32 (PyTorch batch_first). Returns (y, h_n, c_n)."""
    B, T, _ = x_btd.shape
    H = w_hh_t.shape[0]
    D_out = w_lin_t.shape[1]

    vmem = pl.BlockSpec(memory_space=pltpu.MemorySpace.VMEM)
    y, h_n, c_n = pl.pallas_call(
        functools.partial(_lstm_net_kernel, T=T, B=B),
        out_shape=(jax.ShapeDtypeStruct((B, D_out), jnp.float32),
                   jax.ShapeDtypeStruct((B, H), jnp.float32),
                   jax.ShapeDtypeStruct((B, H), jnp.float32)),
        in_specs=[vmem] * 6,
        out_specs=(vmem, vmem, vmem),
    )(x_btd, w_ih_t, w_hh_t, b_gates, w_lin_t, b_lin)
    return y, h_n, c_n


# -----------------------------------------------------------------------------
# Pure-JAX reference (same math, lax.scan) for validation
# -----------------------------------------------------------------------------
def reference_forward(x_btd, w_ih_t, w_hh_t, b_gates, w_lin_t, b_lin):
    B, T, D = x_btd.shape
    H = w_hh_t.shape[0]

    def step(carry, x_t):
        h, c = carry
        gates = x_t @ w_ih_t + h @ w_hh_t + b_gates[0]
        i_g = jax.nn.sigmoid(gates[:, 0 * H:1 * H])
        f_g = jax.nn.sigmoid(gates[:, 1 * H:2 * H])
        g_g = jnp.tanh(gates[:, 2 * H:3 * H])
        o_g = jax.nn.sigmoid(gates[:, 3 * H:4 * H])
        c_new = f_g * c + i_g * g_g
        h_new = o_g * jnp.tanh(c_new)
        return (h_new, c_new), h_new

    h0 = jnp.zeros((B, H), jnp.float32)
    c0 = jnp.zeros((B, H), jnp.float32)
    (h_n, c_n), _ = lax.scan(step, (h0, c0), jnp.transpose(x_btd, (1, 0, 2)))
    y = jnp.tanh(h_n @ w_lin_t + b_lin[0])
    return y, h_n, c_n


# -----------------------------------------------------------------------------
# Main
# -----------------------------------------------------------------------------
if __name__ == "__main__":
    # Small shapes consistent with the module:
    #   Variables -> 4 features, LSTM hidden = 32, batch = 2, seq = 8.
    # Note: B=2 uses 2 of 8 sublanes; if the workload can batch more sequences,
    # padding/stacking batch to 8 gives ~4x throughput at the same latency.
    B, T, D, H = 2, 8, 4, 32
    D_out = D

    key = jax.random.PRNGKey(0)
    k_x, k_wih, k_whh, k_bih, k_bhh, k_wl, k_bl = jax.random.split(key, 7)

    # Deterministic init mirroring PyTorch's uniform(-1/sqrt(H), 1/sqrt(H)).
    s_lstm = 1.0 / jnp.sqrt(jnp.float32(H))
    w_ih = jax.random.uniform(k_wih, (4 * H, D), jnp.float32, -s_lstm, s_lstm)
    w_hh = jax.random.uniform(k_whh, (4 * H, H), jnp.float32, -s_lstm, s_lstm)
    b_ih = jax.random.uniform(k_bih, (4 * H,), jnp.float32, -s_lstm, s_lstm)
    b_hh = jax.random.uniform(k_bhh, (4 * H,), jnp.float32, -s_lstm, s_lstm)

    s_lin = 1.0 / jnp.sqrt(jnp.float32(H))
    w_lin = jax.random.uniform(k_wl, (D_out, H), jnp.float32, -s_lin, s_lin)
    b_lin = jax.random.uniform(k_bl, (D_out,), jnp.float32, -s_lin, s_lin)

    # Kernel-friendly (pre-transposed, 2-D bias) forms.
    w_ih_t = w_ih.T                                   # (D, 4H)
    w_hh_t = w_hh.T                                   # (H, 4H)
    b_gates = (b_ih + b_hh)[None, :]                  # (1, 4H)
    w_lin_t = w_lin.T                                 # (H, D_out)
    b_lin2 = b_lin[None, :]                           # (1, D_out)

    x = jax.random.normal(k_x, (B, T, D), jnp.float32)

    y, h_n, c_n = customized_network_forward(
        x, w_ih_t, w_hh_t, b_gates, w_lin_t, b_lin2)
    jax.block_until_ready((y, h_n, c_n))

    # Match the PyTorch return structure: (out[:, -1, :], lstm_states)
    lstm_states = [(h_n[None, :, :], c_n[None, :, :])]   # each (1, B, H)
    final_out = y                                         # (B, D_out)

    # Validate against the pure-JAX reference.
    y_ref, h_ref, c_ref = reference_forward(
        x, w_ih_t, w_hh_t, b_gates, w_lin_t, b_lin2)
    assert jnp.allclose(final_out, y_ref, atol=1e-5, rtol=1e-5)
    assert jnp.allclose(h_n, h_ref, atol=1e-5, rtol=1e-5)
    assert jnp.allclose(c_n, c_ref, atol=1e-5, rtol=1e-5)
    assert final_out.shape == (B, D_out)
    assert lstm_states[0][0].shape == (1, B, H)

    print("KERNEL_OK")
</pallas_src>

<mosaic_0001>
module attributes {stable_mosaic.version = 11 : i64} {
  func.func @_lstm_net_kernel(%arg0: memref<2x8x4xf32, #tpu.memory_space<vmem>>, %arg1: memref<4x128xf32, #tpu.memory_space<vmem>>, %arg2: memref<32x128xf32, #tpu.memory_space<vmem>>, %arg3: memref<1x128xf32, #tpu.memory_space<vmem>>, %arg4: memref<32x4xf32, #tpu.memory_space<vmem>>, %arg5: memref<1x4xf32, #tpu.memory_space<vmem>>, %arg6: memref<2x4xf32, #tpu.memory_space<vmem>>, %arg7: memref<2x32xf32, #tpu.memory_space<vmem>>, %arg8: memref<2x32xf32, #tpu.memory_space<vmem>>) attributes {dimension_semantics = [], scalar_prefetch = 0 : i64, scratch_operands = 0 : i64, tpu.core_type = #tpu.core_type<tc>} {
    %c0 = arith.constant 0 : index
    %c0_0 = arith.constant 0 : index
    %c0_1 = arith.constant 0 : index
    %0 = vector.load %arg0[%c0, %c0_0, %c0_1] : memref<2x8x4xf32, #tpu.memory_space<vmem>>, vector<2x8x4xf32>
    %1 = vector.shape_cast %0 : vector<2x8x4xf32> to vector<16x4xf32>
    %c0_2 = arith.constant 0 : index
    %c0_3 = arith.constant 0 : index
    %2 = vector.load %arg1[%c0_2, %c0_3] : memref<4x128xf32, #tpu.memory_space<vmem>>, vector<4x128xf32>
    %cst = arith.constant dense<0.000000e+00> : vector<16x128xf32>
    %3 = tpu.matmul %1, %2, %cst {dimension_numbers = #tpu.dot_dimension_numbers<[1], [0], [0], [1], [0, 0, 1, 1], [], []>} : vector<16x4xf32>, vector<4x128xf32>, vector<16x128xf32> -> vector<16x128xf32>
    %c0_4 = arith.constant 0 : index
    %c0_5 = arith.constant 0 : index
    %4 = vector.load %arg3[%c0_4, %c0_5] : memref<1x128xf32, #tpu.memory_space<vmem>>, vector<1x128xf32>
    %5 = vector.broadcast %4 : vector<1x128xf32> to vector<16x128xf32>
    %6 = arith.addf %3, %5 : vector<16x128xf32>
    %7 = vector.shape_cast %6 : vector<16x128xf32> to vector<2x8x128xf32>
    %8 = tpu.iota {dimensions = array<i32: 1>} : vector<2x128xi32>
    %c64_i32 = arith.constant 64 : i32
    %9 = vector.broadcast %c64_i32 : i32 to vector<2x128xi32>
    %10 = arith.cmpi sge, %8, %9 : vector<2x128xi32>
    %c96_i32 = arith.constant 96 : i32
    %11 = vector.broadcast %c96_i32 : i32 to vector<2x128xi32>
    %12 = arith.cmpi slt, %8, %11 : vector<2x128xi32>
    %13 = arith.andi %10, %12 : vector<2x128xi1>
    %cst_6 = arith.constant 2.000000e+00 : f32
    %cst_7 = arith.constant 1.000000e+00 : f32
    %14 = vector.broadcast %cst_6 : f32 to vector<2x128xf32>
    %15 = vector.broadcast %cst_7 : f32 to vector<2x128xf32>
    %16 = arith.select %13, %14, %15 : vector<2x128xi1>, vector<2x128xf32>
    %cst_8 = arith.constant -1.000000e+00 : f32
    %cst_9 = arith.constant 0.000000e+00 : f32
    %17 = vector.broadcast %cst_8 : f32 to vector<2x128xf32>
    %18 = vector.broadcast %cst_9 : f32 to vector<2x128xf32>
    %19 = arith.select %13, %17, %18 : vector<2x128xi1>, vector<2x128xf32>
    %c0_10 = arith.constant 0 : index
    %c0_11 = arith.constant 0 : index
    %20 = vector.load %arg2[%c0_10, %c0_11] : memref<32x128xf32, #tpu.memory_space<vmem>>, vector<32x128xf32>
    %cst_12 = arith.constant 0.000000e+00 : f32
    %21 = vector.broadcast %cst_12 : f32 to vector<2x32xf32>
    %cst_13 = arith.constant 0.000000e+00 : f32
    %22 = vector.broadcast %cst_13 : f32 to vector<2x32xf32>
    %cst_14 = arith.constant dense<0.000000e+00> : vector<2x128xf32>
    %23 = tpu.matmul %21, %20, %cst_14 {dimension_numbers = #tpu.dot_dimension_numbers<[1], [0], [0], [1], [0, 0, 1, 1], [], []>} : vector<2x32xf32>, vector<32x128xf32>, vector<2x128xf32> -> vector<2x128xf32>
    %24 = vector.extract_strided_slice %7 {offsets = [0, 0, 0], sizes = [2, 1, 128], strides = [1, 1, 1]} : vector<2x8x128xf32> to vector<2x1x128xf32>
    %25 = vector.shape_cast %24 : vector<2x1x128xf32> to vector<2x128xf32>
    %26 = arith.addf %23, %25 : vector<2x128xf32>
    %27 = arith.mulf %26, %16 : vector<2x128xf32>
    %28 = arith.negf %27 : vector<2x128xf32>
    %29 = math.exp %28 : vector<2x128xf32>
    %cst_15 = arith.constant 1.000000e+00 : f32
    %30 = vector.broadcast %cst_15 : f32 to vector<2x128xf32>
    %31 = arith.addf %30, %29 : vector<2x128xf32>
    %32 = arith.divf %30, %31 : vector<2x128xf32>
    %33 = arith.mulf %32, %16 : vector<2x128xf32>
    %34 = arith.addf %33, %19 : vector<2x128xf32>
    %35 = vector.extract_strided_slice %34 {offsets = [0, 0], sizes = [2, 32], strides = [1, 1]} : vector<2x128xf32> to vector<2x32xf32>
    %36 = vector.extract_strided_slice %34 {offsets = [0, 32], sizes = [2, 32], strides = [1, 1]} : vector<2x128xf32> to vector<2x32xf32>
    %37 = vector.extract_strided_slice %34 {offsets = [0, 64], sizes = [2, 32], strides = [1, 1]} : vector<2x128xf32> to vector<2x32xf32>
    %38 = vector.extract_strided_slice %34 {offsets = [0, 96], sizes = [2, 32], strides = [1, 1]} : vector<2x128xf32> to vector<2x32xf32>
    %39 = arith.mulf %36, %22 : vector<2x32xf32>
    %40 = arith.mulf %35, %37 : vector<2x32xf32>
    %41 = arith.addf %39, %40 : vector<2x32xf32>
    %42 = math.tanh %41 : vector<2x32xf32>
    %43 = arith.mulf %38, %42 : vector<2x32xf32>
    %cst_16 = arith.constant dense<0.000000e+00> : vector<2x128xf32>
    %44 = tpu.matmul %43, %20, %cst_16 {dimension_numbers = #tpu.dot_dimension_numbers<[1], [0], [0], [1], [0, 0, 1, 1], [], []>} : vector<2x32xf32>, vector<32x128xf32>, vector<2x128xf32> -> vector<2x128xf32>
    %45 = vector.extract_strided_slice %7 {offsets = [0, 1, 0], sizes = [2, 1, 128], strides = [1, 1, 1]} : vector<2x8x128xf32> to vector<2x1x128xf32>
    %46 = vector.shape_cast %45 : vector<2x1x128xf32> to vector<2x128xf32>
    %47 = arith.addf %44, %46 : vector<2x128xf32>
    %48 = arith.mulf %47, %16 : vector<2x128xf32>
    %49 = arith.negf %48 : vector<2x128xf32>
    %50 = math.exp %49 : vector<2x128xf32>
    %cst_17 = arith.constant 1.000000e+00 : f32
    %51 = vector.broadcast %cst_17 : f32 to vector<2x128xf32>
    %52 = arith.addf %51, %50 : vector<2x128xf32>
    %53 = arith.divf %51, %52 : vector<2x128xf32>
    %54 = arith.mulf %53, %16 : vector<2x128xf32>
    %55 = arith.addf %54, %19 : vector<2x128xf32>
    %56 = vector.extract_strided_slice %55 {offsets = [0, 0], sizes = [2, 32], strides = [1, 1]} : vector<2x128xf32> to vector<2x32xf32>
    %57 = vector.extract_strided_slice %55 {offsets = [0, 32], sizes = [2, 32], strides = [1, 1]} : vector<2x128xf32> to vector<2x32xf32>
    %58 = vector.extract_strided_slice %55 {offsets = [0, 64], sizes = [2, 32], strides = [1, 1]} : vector<2x128xf32> to vector<2x32xf32>
    %59 = vector.extract_strided_slice %55 {offsets = [0, 96], sizes = [2, 32], strides = [1, 1]} : vector<2x128xf32> to vector<2x32xf32>
    %60 = arith.mulf %57, %41 : vector<2x32xf32>
    %61 = arith.mulf %56, %58 : vector<2x32xf32>
    %62 = arith.addf %60, %61 : vector<2x32xf32>
    %63 = math.tanh %62 : vector<2x32xf32>
    %64 = arith.mulf %59, %63 : vector<2x32xf32>
    %cst_18 = arith.constant dense<0.000000e+00> : vector<2x128xf32>
    %65 = tpu.matmul %64, %20, %cst_18 {dimension_numbers = #tpu.dot_dimension_numbers<[1], [0], [0], [1], [0, 0, 1, 1], [], []>} : vector<2x32xf32>, vector<32x128xf32>, vector<2x128xf32> -> vector<2x128xf32>
    %66 = vector.extract_strided_slice %7 {offsets = [0, 2, 0], sizes = [2, 1, 128], strides = [1, 1, 1]} : vector<2x8x128xf32> to vector<2x1x128xf32>
    %67 = vector.shape_cast %66 : vector<2x1x128xf32> to vector<2x128xf32>
    %68 = arith.addf %65, %67 : vector<2x128xf32>
    %69 = arith.mulf %68, %16 : vector<2x128xf32>
    %70 = arith.negf %69 : vector<2x128xf32>
    %71 = math.exp %70 : vector<2x128xf32>
    %cst_19 = arith.constant 1.000000e+00 : f32
    %72 = vector.broadcast %cst_19 : f32 to vector<2x128xf32>
    %73 = arith.addf %72, %71 : vector<2x128xf32>
    %74 = arith.divf %72, %73 : vector<2x128xf32>
    %75 = arith.mulf %74, %16 : vector<2x128xf32>
    %76 = arith.addf %75, %19 : vector<2x128xf32>
    %77 = vector.extract_strided_slice %76 {offsets = [0, 0], sizes = [2, 32], strides = [1, 1]} : vector<2x128xf32> to vector<2x32xf32>
    %78 = vector.extract_strided_slice %76 {offsets = [0, 32], sizes = [2, 32], strides = [1, 1]} : vector<2x128xf32> to vector<2x32xf32>
    %79 = vector.extract_strided_slice %76 {offsets = [0, 64], sizes = [2, 32], strides = [1, 1]} : vector<2x128xf32> to vector<2x32xf32>
    %80 = vector.extract_strided_slice %76 {offsets = [0, 96], sizes = [2, 32], strides = [1, 1]} : vector<2x128xf32> to vector<2x32xf32>
    %81 = arith.mulf %78, %62 : vector<2x32xf32>
    %82 = arith.mulf %77, %79 : vector<2x32xf32>
    %83 = arith.addf %81, %82 : vector<2x32xf32>
    %84 = math.tanh %83 : vector<2x32xf32>
    %85 = arith.mulf %80, %84 : vector<2x32xf32>
    %cst_20 = arith.constant dense<0.000000e+00> : vector<2x128xf32>
    %86 = tpu.matmul %85, %20, %cst_20 {dimension_numbers = #tpu.dot_dimension_numbers<[1], [0], [0], [1], [0, 0, 1, 1], [], []>} : vector<2x32xf32>, vector<32x128xf32>, vector<2x128xf32> -> vector<2x128xf32>
    %87 = vector.extract_strided_slice %7 {offsets = [0, 3, 0], sizes = [2, 1, 128], strides = [1, 1, 1]} : vector<2x8x128xf32> to vector<2x1x128xf32>
    %88 = vector.shape_cast %87 : vector<2x1x128xf32> to vector<2x128xf32>
    %89 = arith.addf %86, %88 : vector<2x128xf32>
    %90 = arith.mulf %89, %16 : vector<2x128xf32>
    %91 = arith.negf %90 : vector<2x128xf32>
    %92 = math.exp %91 : vector<2x128xf32>
    %cst_21 = arith.constant 1.000000e+00 : f32
    %93 = vector.broadcast %cst_21 : f32 to vector<2x128xf32>
    %94 = arith.addf %93, %92 : vector<2x128xf32>
    %95 = arith.divf %93, %94 : vector<2x128xf32>
    %96 = arith.mulf %95, %16 : vector<2x128xf32>
    %97 = arith.addf %96, %19 : vector<2x128xf32>
    %98 = vector.extract_strided_slice %97 {offsets = [0, 0], sizes = [2, 32], strides = [1, 1]} : vector<2x128xf32> to vector<2x32xf32>
    %99 = vector.extract_strided_slice %97 {offsets = [0, 32], sizes = [2, 32], strides = [1, 1]} : vector<2x128xf32> to vector<2x32xf32>
    %100 = vector.extract_strided_slice %97 {offsets = [0, 64], sizes = [2, 32], strides = [1, 1]} : vector<2x128xf32> to vector<2x32xf32>
    %101 = vector.extract_strided_slice %97 {offsets = [0, 96], sizes = [2, 32], strides = [1, 1]} : vector<2x128xf32> to vector<2x32xf32>
    %102 = arith.mulf %99, %83 : vector<2x32xf32>
    %103 = arith.mulf %98, %100 : vector<2x32xf32>
    %104 = arith.addf %102, %103 : vector<2x32xf32>
    %105 = math.tanh %104 : vector<2x32xf32>
    %106 = arith.mulf %101, %105 : vector<2x32xf32>
    %cst_22 = arith.constant dense<0.000000e+00> : vector<2x128xf32>
    %107 = tpu.matmul %106, %20, %cst_22 {dimension_numbers = #tpu.dot_dimension_numbers<[1], [0], [0], [1], [0, 0, 1, 1], [], []>} : vector<2x32xf32>, vector<32x128xf32>, vector<2x128xf32> -> vector<2x128xf32>
    %108 = vector.extract_strided_slice %7 {offsets = [0, 4, 0], sizes = [2, 1, 128], strides = [1, 1, 1]} : vector<2x8x128xf32> to vector<2x1x128xf32>
    %109 = vector.shape_cast %108 : vector<2x1x128xf32> to vector<2x128xf32>
    %110 = arith.addf %107, %109 : vector<2x128xf32>
    %111 = arith.mulf %110, %16 : vector<2x128xf32>
    %112 = arith.negf %111 : vector<2x128xf32>
    %113 = math.exp %112 : vector<2x128xf32>
    %cst_23 = arith.constant 1.000000e+00 : f32
    %114 = vector.broadcast %cst_23 : f32 to vector<2x128xf32>
    %115 = arith.addf %114, %113 : vector<2x128xf32>
    %116 = arith.divf %114, %115 : vector<2x128xf32>
    %117 = arith.mulf %116, %16 : vector<2x128xf32>
    %118 = arith.addf %117, %19 : vector<2x128xf32>
    %119 = vector.extract_strided_slice %118 {offsets = [0, 0], sizes = [2, 32], strides = [1, 1]} : vector<2x128xf32> to vector<2x32xf32>
    %120 = vector.extract_strided_slice %118 {offsets = [0, 32], sizes = [2, 32], strides = [1, 1]} : vector<2x128xf32> to vector<2x32xf32>
    %121 = vector.extract_strided_slice %118 {offsets = [0, 64], sizes = [2, 32], strides = [1, 1]} : vector<2x128xf32> to vector<2x32xf32>
    %122 = vector.extract_strided_slice %118 {offsets = [0, 96], sizes = [2, 32], strides = [1, 1]} : vector<2x128xf32> to vector<2x32xf32>
    %123 = arith.mulf %120, %104 : vector<2x32xf32>
    %124 = arith.mulf %119, %121 : vector<2x32xf32>
    %125 = arith.addf %123, %124 : vector<2x32xf32>
    %126 = math.tanh %125 : vector<2x32xf32>
    %127 = arith.mulf %122, %126 : vector<2x32xf32>
    %cst_24 = arith.constant dense<0.000000e+00> : vector<2x128xf32>
    %128 = tpu.matmul %127, %20, %cst_24 {dimension_numbers = #tpu.dot_dimension_numbers<[1], [0], [0], [1], [0, 0, 1, 1], [], []>} : vector<2x32xf32>, vector<32x128xf32>, vector<2x128xf32> -> vector<2x128xf32>
    %129 = vector.extract_strided_slice %7 {offsets = [0, 5, 0], sizes = [2, 1, 128], strides = [1, 1, 1]} : vector<2x8x128xf32> to vector<2x1x128xf32>
    %130 = vector.shape_cast %129 : vector<2x1x128xf32> to vector<2x128xf32>
    %131 = arith.addf %128, %130 : vector<2x128xf32>
    %132 = arith.mulf %131, %16 : vector<2x128xf32>
    %133 = arith.negf %132 : vector<2x128xf32>
    %134 = math.exp %133 : vector<2x128xf32>
    %cst_25 = arith.constant 1.000000e+00 : f32
    %135 = vector.broadcast %cst_25 : f32 to vector<2x128xf32>
    %136 = arith.addf %135, %134 : vector<2x128xf32>
    %137 = arith.divf %135, %136 : vector<2x128xf32>
    %138 = arith.mulf %137, %16 : vector<2x128xf32>
    %139 = arith.addf %138, %19 : vector<2x128xf32>
    %140 = vector.extract_strided_slice %139 {offsets = [0, 0], sizes = [2, 32], strides = [1, 1]} : vector<2x128xf32> to vector<2x32xf32>
    %141 = vector.extract_strided_slice %139 {offsets = [0, 32], sizes = [2, 32], strides = [1, 1]} : vector<2x128xf32> to vector<2x32xf32>
    %142 = vector.extract_strided_slice %139 {offsets = [0, 64], sizes = [2, 32], strides = [1, 1]} : vector<2x128xf32> to vector<2x32xf32>
    %143 = vector.extract_strided_slice %139 {offsets = [0, 96], sizes = [2, 32], strides = [1, 1]} : vector<2x128xf32> to vector<2x32xf32>
    %144 = arith.mulf %141, %125 : vector<2x32xf32>
    %145 = arith.mulf %140, %142 : vector<2x32xf32>
    %146 = arith.addf %144, %145 : vector<2x32xf32>
    %147 = math.tanh %146 : vector<2x32xf32>
    %148 = arith.mulf %143, %147 : vector<2x32xf32>
    %cst_26 = arith.constant dense<0.000000e+00> : vector<2x128xf32>
    %149 = tpu.matmul %148, %20, %cst_26 {dimension_numbers = #tpu.dot_dimension_numbers<[1], [0], [0], [1], [0, 0, 1, 1], [], []>} : vector<2x32xf32>, vector<32x128xf32>, vector<2x128xf32> -> vector<2x128xf32>
    %150 = vector.extract_strided_slice %7 {offsets = [0, 6, 0], sizes = [2, 1, 128], strides = [1, 1, 1]} : vector<2x8x128xf32> to vector<2x1x128xf32>
    %151 = vector.shape_cast %150 : vector<2x1x128xf32> to vector<2x128xf32>
    %152 = arith.addf %149, %151 : vector<2x128xf32>
    %153 = arith.mulf %152, %16 : vector<2x128xf32>
    %154 = arith.negf %153 : vector<2x128xf32>
    %155 = math.exp %154 : vector<2x128xf32>
    %cst_27 = arith.constant 1.000000e+00 : f32
    %156 = vector.broadcast %cst_27 : f32 to vector<2x128xf32>
    %157 = arith.addf %156, %155 : vector<2x128xf32>
    %158 = arith.divf %156, %157 : vector<2x128xf32>
    %159 = arith.mulf %158, %16 : vector<2x128xf32>
    %160 = arith.addf %159, %19 : vector<2x128xf32>
    %161 = vector.extract_strided_slice %160 {offsets = [0, 0], sizes = [2, 32], strides = [1, 1]} : vector<2x128xf32> to vector<2x32xf32>
    %162 = vector.extract_strided_slice %160 {offsets = [0, 32], sizes = [2, 32], strides = [1, 1]} : vector<2x128xf32> to vector<2x32xf32>
    %163 = vector.extract_strided_slice %160 {offsets = [0, 64], sizes = [2, 32], strides = [1, 1]} : vector<2x128xf32> to vector<2x32xf32>
    %164 = vector.extract_strided_slice %160 {offsets = [0, 96], sizes = [2, 32], strides = [1, 1]} : vector<2x128xf32> to vector<2x32xf32>
    %165 = arith.mulf %162, %146 : vector<2x32xf32>
    %166 = arith.mulf %161, %163 : vector<2x32xf32>
    %167 = arith.addf %165, %166 : vector<2x32xf32>
    %168 = math.tanh %167 : vector<2x32xf32>
    %169 = arith.mulf %164, %168 : vector<2x32xf32>
    %cst_28 = arith.constant dense<0.000000e+00> : vector<2x128xf32>
    %170 = tpu.matmul %169, %20, %cst_28 {dimension_numbers = #tpu.dot_dimension_numbers<[1], [0], [0], [1], [0, 0, 1, 1], [], []>} : vector<2x32xf32>, vector<32x128xf32>, vector<2x128xf32> -> vector<2x128xf32>
    %171 = vector.extract_strided_slice %7 {offsets = [0, 7, 0], sizes = [2, 1, 128], strides = [1, 1, 1]} : vector<2x8x128xf32> to vector<2x1x128xf32>
    %172 = vector.shape_cast %171 : vector<2x1x128xf32> to vector<2x128xf32>
    %173 = arith.addf %170, %172 : vector<2x128xf32>
    %174 = arith.mulf %173, %16 : vector<2x128xf32>
    %175 = arith.negf %174 : vector<2x128xf32>
    %176 = math.exp %175 : vector<2x128xf32>
    %cst_29 = arith.constant 1.000000e+00 : f32
    %177 = vector.broadcast %cst_29 : f32 to vector<2x128xf32>
    %178 = arith.addf %177, %176 : vector<2x128xf32>
    %179 = arith.divf %177, %178 : vector<2x128xf32>
    %180 = arith.mulf %179, %16 : vector<2x128xf32>
    %181 = arith.addf %180, %19 : vector<2x128xf32>
    %182 = vector.extract_strided_slice %181 {offsets = [0, 0], sizes = [2, 32], strides = [1, 1]} : vector<2x128xf32> to vector<2x32xf32>
    %183 = vector.extract_strided_slice %181 {offsets = [0, 32], sizes = [2, 32], strides = [1, 1]} : vector<2x128xf32> to vector<2x32xf32>
    %184 = vector.extract_strided_slice %181 {offsets = [0, 64], sizes = [2, 32], strides = [1, 1]} : vector<2x128xf32> to vector<2x32xf32>
    %185 = vector.extract_strided_slice %181 {offsets = [0, 96], sizes = [2, 32], strides = [1, 1]} : vector<2x128xf32> to vector<2x32xf32>
    %186 = arith.mulf %183, %167 : vector<2x32xf32>
    %187 = arith.mulf %182, %184 : vector<2x32xf32>
    %188 = arith.addf %186, %187 : vector<2x32xf32>
    %189 = math.tanh %188 : vector<2x32xf32>
    %190 = arith.mulf %185, %189 : vector<2x32xf32>
    %c0_30 = arith.constant 0 : index
    %c0_31 = arith.constant 0 : index
    %191 = vector.load %arg4[%c0_30, %c0_31] : memref<32x4xf32, #tpu.memory_space<vmem>>, vector<32x4xf32>
    %cst_32 = arith.constant dense<0.000000e+00> : vector<2x4xf32>
    %192 = tpu.matmul %190, %191, %cst_32 {dimension_numbers = #tpu.dot_dimension_numbers<[1], [0], [0], [1], [0, 0, 1, 1], [], []>} : vector<2x32xf32>, vector<32x4xf32>, vector<2x4xf32> -> vector<2x4xf32>
    %c0_33 = arith.constant 0 : index
    %c0_34 = arith.constant 0 : index
    %193 = vector.load %arg5[%c0_33, %c0_34] : memref<1x4xf32, #tpu.memory_space<vmem>>, vector<1x4xf32>
    %194 = vector.broadcast %193 : vector<1x4xf32> to vector<2x4xf32>
    %195 = arith.addf %192, %194 : vector<2x4xf32>
    %196 = math.tanh %195 : vector<2x4xf32>
    %c0_35 = arith.constant 0 : index
    %c0_36 = arith.constant 0 : index
    %197 = vector.load %arg6[%c0_35, %c0_36] : memref<2x4xf32, #tpu.memory_space<vmem>>, vector<2x4xf32>
    tpu.vector_store %arg6[%c0_35, %c0_36], %196 {strides = array<i32>} : memref<2x4xf32, #tpu.memory_space<vmem>>, vector<2x4xf32>,
    %c0_37 = arith.constant 0 : index
    %c0_38 = arith.constant 0 : index
    %198 = vector.load %arg7[%c0_37, %c0_38] : memref<2x32xf32, #tpu.memory_space<vmem>>, vector<2x32xf32>
    tpu.vector_store %arg7[%c0_37, %c0_38], %190 {strides = array<i32>} : memref<2x32xf32, #tpu.memory_space<vmem>>, vector<2x32xf32>,
    %c0_39 = arith.constant 0 : index
    %c0_40 = arith.constant 0 : index
    %199 = vector.load %arg8[%c0_39, %c0_40] : memref<2x32xf32, #tpu.memory_space<vmem>>, vector<2x32xf32>
    tpu.vector_store %arg8[%c0_39, %c0_40], %188 {strides = array<i32>} : memref<2x32xf32, #tpu.memory_space<vmem>>, vector<2x32xf32>,
    return
  }
}

</mosaic_0001>

<llo_original>
// kernel: customized_network_forward.1
$region0: #{customized_network_forward.1}
  #allocation0 [shape = 'u32[]', space=smem, size = 0x4, offset = 0x4, fixed_abs, tag = 'smem constant byte address 0x4 - core index']
  #allocation1 [shape = 'u32[144,128]{1,0:T(1,128)}', space=vmem, size = 0x12000, scoped, tag = 'internal scratch']
  %s0 = inlined_call_operand.vmem [shape: f32[2,8,4], index: 0, kind: input, shape index: {}]
  %s1 = inlined_call_operand.vmem [shape: f32[4,128], index: 1, kind: input, shape index: {}]
  %s2 = inlined_call_operand.vmem [shape: f32[32,128], index: 2, kind: input, shape index: {}]
  %s3 = inlined_call_operand.vmem [shape: f32[1,128], index: 3, kind: input, shape index: {}]
  %s4 = inlined_call_operand.vmem [shape: f32[32,4], index: 4, kind: input, shape index: {}]
  %s5 = inlined_call_operand.vmem [shape: f32[1,4], index: 5, kind: input, shape index: {}]
  %s6 = inlined_call_operand.hbm [shape: f32[2,4], index: 6, kind: output, shape index: {0}]
  %s7 = inlined_call_operand.hbm [shape: f32[2,32], index: 7, kind: output, shape index: {1}]
  %s8 = inlined_call_operand.hbm [shape: f32[2,32], index: 8, kind: output, shape index: {2}]
  %9 = xla_tuple %s6, %s7, %s8
  %s10 = sld [smem:[#allocation0]]
  $region50: #{customized_network_forward.1} parent=0
    _
  %s12 = ssub.s32 1, %s10
  %s13 = scalar_select 0, %s12, %s10
  $region1: #{customized_network_forward.1} parent=0
    #allocation2 [shape = 'u8[1024]{0}', space=vmem, size = 0x400, scoped, tag = 'output window, operand 0, single buffered']
    #allocation3 [shape = 's32[1]{0}', space=sflag, size = 0x4, scoped, tag = 'scoped memory for customized_network_forward.1']
    #allocation4 [shape = 'u8[1024]{0}', space=vmem, size = 0x400, scoped, tag = 'output window, operand 1, single buffered']
    #allocation5 [shape = 's32[1]{0}', space=sflag, size = 0x4, scoped, tag = 'scoped memory for customized_network_forward.1']
    #allocation6 [shape = 'u8[1024]{0}', space=vmem, size = 0x400, scoped, tag = 'output window, operand 2, single buffered']
    %14 = vsyncpa [#allocation3], 0
    %15 = vsyncpa [#allocation5], 0
    // Predicated region
    $region2: #{customized_network_forward.1} parent=1 // pred_check
      _
    $region3: #{customized_network_forward.1} parent=1 // pred_check_branch
      %17 = sbr.rel (0) target = $region5
    $region4: #{customized_network_forward.1} parent=1 // pred_region
      _
    $region5: #{customized_network_forward.1} parent=1 // pred_fallthru
      _
    // Predicated region
    $region6: #{customized_network_forward.1} parent=1 // pred_check
      _
    $region7: #{customized_network_forward.1} parent=1 // pred_check_branch
      %19 = sbr.rel (0) target = $region9
    $region8: #{customized_network_forward.1} parent=1 // pred_region
      _
    $region9: #{customized_network_forward.1} parent=1 // pred_fallthru
      _
    // Predicated region
    $region10: #{customized_network_forward.1} parent=1 // pred_check
      _
    $region11: #{customized_network_forward.1} parent=1 // pred_check_branch
      %21 = sbr.rel (0) target = $region13
    $region12: #{customized_network_forward.1} parent=1 // pred_region
      _
    $region13: #{customized_network_forward.1} parent=1 // pred_fallthru
      _
    // Predicated region
    $region14: #{customized_network_forward.1} parent=1 // pred_check
      _
    $region15: #{customized_network_forward.1} parent=1 // pred_check_branch
      %23 = sbr.rel (0) target = $region17
    $region16: #{customized_network_forward.1} parent=1 // pred_region
      _
    $region17: #{customized_network_forward.1} parent=1 // pred_fallthru
      _
    // Predicated region
    $region18: #{customized_network_forward.1} parent=1 // pred_check
      _
    $region19: #{customized_network_forward.1} parent=1 // pred_check_branch
      %25 = sbr.rel (0) target = $region21
    $region20: #{customized_network_forward.1} parent=1 // pred_region
      _
    $region21: #{customized_network_forward.1} parent=1 // pred_fallthru
      _
    // Predicated region
    $region22: #{customized_network_forward.1} parent=1 // pred_check
      _
    $region23: #{customized_network_forward.1} parent=1 // pred_check_branch
      %27 = sbr.rel (0) target = $region25
    $region24: #{customized_network_forward.1} parent=1 // pred_region
      _
    $region25: #{customized_network_forward.1} parent=1 // pred_fallthru
      _
    %v28 = vld [vmem:[%s0] sm:$0xff]
    %v29 = vld [vmem:[%s0 + $0x8] sm:$0xff]
    %v30 = vld [vmem:[%s1] sm:$0xf]
    %v31 = vld [vmem:[%s3] sm:$0x1]
    %v33 = vlaneseq
    %v34 = vshrl.u32 %v33, 7
    %v35 = vsub.s32 0, %v34
    %v36 = vrot.slane %v31, %v35
    %vm38 = vcmask 31744
    %v40 = vsel %vm38, %v28, 0
    %v43 = vsel %vm38, %v29, 0
    %vm45 = vcmask 1043456
    %v47 = vsel %vm45, %v30, 0
    %49 = vmatprep.subr.mxu0 0.0
    %50 = vmatpush1.msra.mxu0 %v47
    %51 = vmatprep.subr.mxu0 0.0
    %52 = vmatpush1.msra.mxu0 0.0
    %53 = vmatprep.subr.mxu0 0.0
    %54 = vmatpush1.msra.mxu0 0.0
    %55 = vmatprep.subr.mxu0 0.0
    %56 = vmatpush1.msra.mxu0 0.0
    %57 = vmatprep.subr.mxu0 0.0
    %58 = vmatpush1.msra.mxu0 0.0
    %59 = vmatprep.subr.mxu0 0.0
    %60 = vmatpush1.msra.mxu0 0.0
    %61 = vmatprep.subr.mxu0 0.0
    %62 = vmatpush1.msra.mxu0 0.0
    %63 = vmatprep.subr.mxu0 0.0
    %64 = vmatpush1.msra.mxu0 0.0
    %65 = vmatprep.subr.mxu0 0.0
    %66 = vmatpush1.msra.mxu0 0.0
    %67 = vmatprep.subr.mxu0 0.0
    %68 = vmatpush1.msra.mxu0 0.0
    %69 = vmatprep.subr.mxu0 0.0
    %70 = vmatpush1.msra.mxu0 0.0
    %71 = vmatprep.subr.mxu0 0.0
    %72 = vmatpush1.msra.mxu0 0.0
    %73 = vmatprep.subr.mxu0 0.0
    %74 = vmatpush1.msra.mxu0 0.0
    %75 = vmatprep.subr.mxu0 0.0
    %76 = vmatpush1.msra.mxu0 0.0
    %77 = vmatprep.subr.mxu0 0.0
    %78 = vmatpush1.msra.mxu0 0.0
    %79 = vmatprep.subr.mxu0 0.0
    %80 = vmatpush1.msra.mxu0 0.0
    %81 = vmatprep.subr.mxu0 0.0
    %82 = vmatpush1.msra.mxu0 0.0
    %83 = vmatprep.subr.mxu0 0.0
    %84 = vmatpush1.msra.mxu0 0.0
    %85 = vmatprep.subr.mxu0 0.0
    %86 = vmatpush1.msra.mxu0 0.0
    %87 = vmatprep.subr.mxu0 0.0
    %88 = vmatpush1.msra.mxu0 0.0
    %89 = vmatprep.subr.mxu0 0.0
    %90 = vmatpush1.msra.mxu0 0.0
    %91 = vmatprep.subr.mxu0 0.0
    %92 = vmatpush1.msra.mxu0 0.0
    %93 = vmatprep.subr.mxu0 0.0
    %94 = vmatpush1.msra.mxu0 0.0
    %95 = vmatprep.subr.mxu0 0.0
    %96 = vmatpush1.msra.mxu0 0.0
    %97 = vmatprep.subr.mxu0 0.0
    %98 = vmatpush1.msra.mxu0 0.0
    %99 = vmatprep.subr.mxu0 0.0
    %100 = vmatpush1.msra.mxu0 0.0
    %101 = vmatprep.subr.mxu0 0.0
    %102 = vmatpush1.msra.mxu0 0.0
    %103 = vmatprep.subr.mxu0 0.0
    %104 = vmatpush1.msra.mxu0 0.0
    %105 = vmatprep.subr.mxu0 0.0
    %106 = vmatpush1.msra.mxu0 0.0
    %107 = vmatprep.subr.mxu0 0.0
    %108 = vmatpush1.msra.mxu0 0.0
    %109 = vmatprep.subr.mxu0 0.0
    %110 = vmatpush1.msra.mxu0 0.0
    %111 = vmatprep.subr.mxu0 0.0
    %112 = vmatpush1.msra.mxu0 0.0
    %113 = vmatprep.mubr.f32.mxu0 0.0
    %114 = vmatmul.mubr.f32.gmra.mrb[0].mxu0 %v40
    %v115 = vpop.f32.mrb[0].mxu0
    %v116 = vadd.f32 %v36, %v115
    %v117 = vpop.f32.mrb[0].mxu0
    %118 = vmatprep.mubr.f32.mxu0 0.0
    %119 = vmatmul.mubr.f32.gmra.mrb[0].mxu0 %v43
    %v120 = vpop.f32.mrb[0].mxu0
    %v121 = vadd.f32 %v36, %v120
    %v122 = vpop.f32.mrb[0].mxu0
    %123 = vdwg.mxu0
    %v124 = vlaneseq
    %v125 = vand.u32 %v124, 127
    %vm126 = vcmp.ge.s32.totalorder %v125, 64
    %vm127 = vcmp.lt.s32.totalorder %v125, 96
    %vm128 = vmand %vm126, %vm127
    %v129 = vsel %vm128, 2.0, 1.0
    %v130 = vsel %vm128, -1.0, 0.0
    %v131 = vld [vmem:[%s2] sm:$0xff]
    %v132 = vld [vmem:[%s2 + $0x8] sm:$0xff]
    %v133 = vld [vmem:[%s2 + $0x10] sm:$0xff]
    %v134 = vld [vmem:[%s2 + $0x18] sm:$0xff]
    %v137 = vrot.slane %v121, 7
    %vm138 = vcmask 1041409
    %v139 = vsel %vm138, %v137, %v116
    %vm141 = vcmask 261120
    %v143 = vsel %vm141, 0.0, 0
    %145 = vmatprep.subr.mxu0 0.0
    %146 = vmatpush1.msra.mxu0 %v131
    %147 = vmatprep.subr.mxu0 0.0
    %148 = vmatpush1.msra.mxu0 %v132
    %149 = vmatprep.subr.mxu0 0.0
    %150 = vmatpush1.msra.mxu0 %v133
    %151 = vmatprep.subr.mxu0 0.0
    %152 = vmatpush1.msra.mxu0 %v134
    %153 = vmatprep.subr.mxu0 0.0
    %154 = vmatpush1.msra.mxu0 0.0
    %155 = vmatprep.subr.mxu0 0.0
    %156 = vmatpush1.msra.mxu0 0.0
    %157 = vmatprep.subr.mxu0 0.0
    %158 = vmatpush1.msra.mxu0 0.0
    %159 = vmatprep.subr.mxu0 0.0
    %160 = vmatpush1.msra.mxu0 0.0
    %161 = vmatprep.subr.mxu0 0.0
    %162 = vmatpush1.msra.mxu0 0.0
    %163 = vmatprep.subr.mxu0 0.0
    %164 = vmatpush1.msra.mxu0 0.0
    %165 = vmatprep.subr.mxu0 0.0
    %166 = vmatpush1.msra.mxu0 0.0
    %167 = vmatprep.subr.mxu0 0.0
    %168 = vmatpush1.msra.mxu0 0.0
    %169 = vmatprep.subr.mxu0 0.0
    %170 = vmatpush1.msra.mxu0 0.0
    %171 = vmatprep.subr.mxu0 0.0
    %172 = vmatpush1.msra.mxu0 0.0
    %173 = vmatprep.subr.mxu0 0.0
    %174 = vmatpush1.msra.mxu0 0.0
    %175 = vmatprep.subr.mxu0 0.0
    %176 = vmatpush1.msra.mxu0 0.0
    %177 = vmatprep.subr.mxu0 0.0
    %178 = vmatpush1.msra.mxu0 0.0
    %179 = vmatprep.subr.mxu0 0.0
    %180 = vmatpush1.msra.mxu0 0.0
    %181 = vmatprep.subr.mxu0 0.0
    %182 = vmatpush1.msra.mxu0 0.0
    %183 = vmatprep.subr.mxu0 0.0
    %184 = vmatpush1.msra.mxu0 0.0
    %185 = vmatprep.subr.mxu0 0.0
    %186 = vmatpush1.msra.mxu0 0.0
    %187 = vmatprep.subr.mxu0 0.0
    %188 = vmatpush1.msra.mxu0 0.0
    %189 = vmatprep.subr.mxu0 0.0
    %190 = vmatpush1.msra.mxu0 0.0
    %191 = vmatprep.subr.mxu0 0.0
    %192 = vmatpush1.msra.mxu0 0.0
    %193 = vmatprep.subr.mxu0 0.0
    %194 = vmatpush1.msra.mxu0 0.0
    %195 = vmatprep.subr.mxu0 0.0
    %196 = vmatpush1.msra.mxu0 0.0
    %197 = vmatprep.subr.mxu0 0.0
    %198 = vmatpush1.msra.mxu0 0.0
    %199 = vmatprep.subr.mxu0 0.0
    %200 = vmatpush1.msra.mxu0 0.0
    %201 = vmatprep.subr.mxu0 0.0
    %202 = vmatpush1.msra.mxu0 0.0
    %203 = vmatprep.subr.mxu0 0.0
    %204 = vmatpush1.msra.mxu0 0.0
    %205 = vmatprep.subr.mxu0 0.0
    %206 = vmatpush1.msra.mxu0 0.0
    %207 = vmatprep.subr.mxu0 0.0
    %208 = vmatpush1.msra.mxu0 0.0
    %209 = vmatprep.mubr.f32.mxu0 0.0
    %210 = vmatmul.mubr.f32.gmra.mrb[0].mxu0 %v143
    %v211 = vpop.f32.mrb[0].mxu0
    %v212 = vadd.f32 %v139, %v211
    %v213 = vpop.f32.mrb[0].mxu0
    %214 = vdwg.mxu0
    %v215 = vmul.f32 %v212, %v129
    %v216 = vxor.u32 %v215, 2147483648
    %v217 = vmul.f32 %v216, 1.442695
    %v218 = vpow.pop %v217
    %v219 = vadd.f32 %v218, 1.0
    %v220 = vrcp.pop %v219
    %v221 = vmul.f32 1.0, %v220
    %v222 = vmul.f32 %v221, %v129
    %v223 = vadd.f32 %v222, %v130
    %v224 = vmul.f32 %v223, 0.0
    %226 = vrot.lane.b32.xlu0 %v223, 64
    %v227 = vpop.permute.xlu0 %226
    %v229 = vmul.f32 %v223, %v227
    %231 = vrot.lane.b32.xlu0 %v229, 32
    %v232 = vpop.permute.xlu0 %231
    %v234 = vadd.f32 %v224, %v232
    %v235 = vtanh.pop %v234
    %237 = vrot.lane.b32.xlu0 %v235, 64
    %v238 = vpop.permute.xlu0 %237
    %v240 = vmul.f32 %v223, %v238
    %242 = vrot.lane.b32.xlu0 %v240, 32
    %v243 = vpop.permute.xlu0 %242
    %v244 = vrot.slane %v116, 1
    %v245 = vsel %vm138, %v121, %v244
    %v247 = vsel %vm141, %v243, 0
    %249 = vmatprep.subr.mxu0 0.0
    %250 = vmatpush1.msra.mxu0 %v131
    %251 = vmatprep.subr.mxu0 0.0
    %252 = vmatpush1.msra.mxu0 %v132
    %253 = vmatprep.subr.mxu0 0.0
    %254 = vmatpush1.msra.mxu0 %v133
    %255 = vmatprep.subr.mxu0 0.0
    %256 = vmatpush1.msra.mxu0 %v134
    %257 = vmatprep.subr.mxu0 0.0
    %258 = vmatpush1.msra.mxu0 0.0
    %259 = vmatprep.subr.mxu0 0.0
    %260 = vmatpush1.msra.mxu0 0.0
    %261 = vmatprep.subr.mxu0 0.0
    %262 = vmatpush1.msra.mxu0 0.0
    %263 = vmatprep.subr.mxu0 0.0
    %264 = vmatpush1.msra.mxu0 0.0
    %265 = vmatprep.subr.mxu0 0.0
    %266 = vmatpush1.msra.mxu0 0.0
    %267 = vmatprep.subr.mxu0 0.0
    %268 = vmatpush1.msra.mxu0 0.0
    %269 = vmatprep.subr.mxu0 0.0
    %270 = vmatpush1.msra.mxu0 0.0
    %271 = vmatprep.subr.mxu0 0.0
    %272 = vmatpush1.msra.mxu0 0.0
    %273 = vmatprep.subr.mxu0 0.0
    %274 = vmatpush1.msra.mxu0 0.0
    %275 = vmatprep.subr.mxu0 0.0
    %276 = vmatpush1.msra.mxu0 0.0
    %277 = vmatprep.subr.mxu0 0.0
    %278 = vmatpush1.msra.mxu0 0.0
    %279 = vmatprep.subr.mxu0 0.0
    %280 = vmatpush1.msra.mxu0 0.0
    %281 = vmatprep.subr.mxu0 0.0
    %282 = vmatpush1.msra.mxu0 0.0
    %283 = vmatprep.subr.mxu0 0.0
    %284 = vmatpush1.msra.mxu0 0.0
    %285 = vmatprep.subr.mxu0 0.0
    %286 = vmatpush1.msra.mxu0 0.0
    %287 = vmatprep.subr.mxu0 0.0
    %288 = vmatpush1.msra.mxu0 0.0
    %289 = vmatprep.subr.mxu0 0.0
    %290 = vmatpush1.msra.mxu0 0.0
    %291 = vmatprep.subr.mxu0 0.0
    %292 = vmatpush1.msra.mxu0 0.0
    %293 = vmatprep.subr.mxu0 0.0
    %294 = vmatpush1.msra.mxu0 0.0
    %295 = vmatprep.subr.mxu0 0.0
    %296 = vmatpush1.msra.mxu0 0.0
    %297 = vmatprep.subr.mxu0 0.0
    %298 = vmatpush1.msra.mxu0 0.0
    %299 = vmatprep.subr.mxu0 0.0
    %300 = vmatpush1.msra.mxu0 0.0
    %301 = vmatprep.subr.mxu0 0.0
    %302 = vmatpush1.msra.mxu0 0.0
    %303 = vmatprep.subr.mxu0 0.0
    %304 = vmatpush1.msra.mxu0 0.0
    %305 = vmatprep.subr.mxu0 0.0
    %306 = vmatpush1.msra.mxu0 0.0
    %307 = vmatprep.subr.mxu0 0.0
    %308 = vmatpush1.msra.mxu0 0.0
    %309 = vmatprep.subr.mxu0 0.0
    %310 = vmatpush1.msra.mxu0 0.0
    %311 = vmatprep.subr.mxu0 0.0
    %312 = vmatpush1.msra.mxu0 0.0
    %313 = vmatprep.mubr.f32.mxu0 0.0
    %314 = vmatmul.mubr.f32.gmra.mrb[0].mxu0 %v247
    %v315 = vpop.f32.mrb[0].mxu0
    %v316 = vadd.f32 %v245, %v315
    %v317 = vpop.f32.mrb[0].mxu0
    %318 = vdwg.mxu0
    %v319 = vmul.f32 %v316, %v129
    %v320 = vxor.u32 %v319, 2147483648
    %v321 = vmul.f32 %v320, 1.442695
    %v322 = vpow.pop %v321
    %v323 = vadd.f32 %v322, 1.0
    %v324 = vrcp.pop %v323
    %v325 = vmul.f32 1.0, %v324
    %v326 = vmul.f32 %v325, %v129
    %v327 = vadd.f32 %v326, %v130
    %v328 = vmul.f32 %v327, %v234
    %330 = vrot.lane.b32.xlu0 %v327, 64
    %v331 = vpop.permute.xlu0 %330
    %v333 = vmul.f32 %v327, %v331
    %335 = vrot.lane.b32.xlu0 %v333, 32
    %v336 = vpop.permute.xlu0 %335
    %v338 = vadd.f32 %v328, %v336
    %v339 = vtanh.pop %v338
    %341 = vrot.lane.b32.xlu0 %v339, 64
    %v342 = vpop.permute.xlu0 %341
    %v344 = vmul.f32 %v327, %v342
    %346 = vrot.lane.b32.xlu0 %v344, 32
    %v347 = vpop.permute.xlu0 %346
    %v348 = vrot.slane %v116, 2
    %v349 = vrot.slane %v121, 1
    %v350 = vsel %vm138, %v349, %v348
    %v352 = vsel %vm141, %v347, 0
    %354 = vmatprep.subr.mxu0 0.0
    %355 = vmatpush1.msra.mxu0 %v131
    %356 = vmatprep.subr.mxu0 0.0
    %357 = vmatpush1.msra.mxu0 %v132
    %358 = vmatprep.subr.mxu0 0.0
    %359 = vmatpush1.msra.mxu0 %v133
    %360 = vmatprep.subr.mxu0 0.0
    %361 = vmatpush1.msra.mxu0 %v134
    %362 = vmatprep.subr.mxu0 0.0
    %363 = vmatpush1.msra.mxu0 0.0
    %364 = vmatprep.subr.mxu0 0.0
    %365 = vmatpush1.msra.mxu0 0.0
    %366 = vmatprep.subr.mxu0 0.0
    %367 = vmatpush1.msra.mxu0 0.0
    %368 = vmatprep.subr.mxu0 0.0
    %369 = vmatpush1.msra.mxu0 0.0
    %370 = vmatprep.subr.mxu0 0.0
    %371 = vmatpush1.msra.mxu0 0.0
    %372 = vmatprep.subr.mxu0 0.0
    %373 = vmatpush1.msra.mxu0 0.0
    %374 = vmatprep.subr.mxu0 0.0
    %375 = vmatpush1.msra.mxu0 0.0
    %376 = vmatprep.subr.mxu0 0.0
    %377 = vmatpush1.msra.mxu0 0.0
    %378 = vmatprep.subr.mxu0 0.0
    %379 = vmatpush1.msra.mxu0 0.0
    %380 = vmatprep.subr.mxu0 0.0
    %381 = vmatpush1.msra.mxu0 0.0
    %382 = vmatprep.subr.mxu0 0.0
    %383 = vmatpush1.msra.mxu0 0.0
    %384 = vmatprep.subr.mxu0 0.0
    %385 = vmatpush1.msra.mxu0 0.0
    %386 = vmatprep.subr.mxu0 0.0
    %387 = vmatpush1.msra.mxu0 0.0
    %388 = vmatprep.subr.mxu0 0.0
    %389 = vmatpush1.msra.mxu0 0.0
    %390 = vmatprep.subr.mxu0 0.0
    %391 = vmatpush1.msra.mxu0 0.0
    %392 = vmatprep.subr.mxu0 0.0
    %393 = vmatpush1.msra.mxu0 0.0
    %394 = vmatprep.subr.mxu0 0.0
    %395 = vmatpush1.msra.mxu0 0.0
    %396 = vmatprep.subr.mxu0 0.0
    %397 = vmatpush1.msra.mxu0 0.0
    %398 = vmatprep.subr.mxu0 0.0
    %399 = vmatpush1.msra.mxu0 0.0
    %400 = vmatprep.subr.mxu0 0.0
    %401 = vmatpush1.msra.mxu0 0.0
    %402 = vmatprep.subr.mxu0 0.0
    %403 = vmatpush1.msra.mxu0 0.0
    %404 = vmatprep.subr.mxu0 0.0
    %405 = vmatpush1.msra.mxu0 0.0
    %406 = vmatprep.subr.mxu0 0.0
    %407 = vmatpush1.msra.mxu0 0.0
    %408 = vmatprep.subr.mxu0 0.0
    %409 = vmatpush1.msra.mxu0 0.0
    %410 = vmatprep.subr.mxu0 0.0
    %411 = vmatpush1.msra.mxu0 0.0
    %412 = vmatprep.subr.mxu0 0.0
    %413 = vmatpush1.msra.mxu0 0.0
    %414 = vmatprep.subr.mxu0 0.0
    %415 = vmatpush1.msra.mxu0 0.0
    %416 = vmatprep.subr.mxu0 0.0
    %417 = vmatpush1.msra.mxu0 0.0
    %418 = vmatprep.mubr.f32.mxu0 0.0
    %419 = vmatmul.mubr.f32.gmra.mrb[0].mxu0 %v352
    %v420 = vpop.f32.mrb[0].mxu0
    %v421 = vadd.f32 %v350, %v420
    %v422 = vpop.f32.mrb[0].mxu0
    %423 = vdwg.mxu0
    %v424 = vmul.f32 %v421, %v129
    %v425 = vxor.u32 %v424, 2147483648
    %v426 = vmul.f32 %v425, 1.442695
    %v427 = vpow.pop %v426
    %v428 = vadd.f32 %v427, 1.0
    %v429 = vrcp.pop %v428
    %v430 = vmul.f32 1.0, %v429
    %v431 = vmul.f32 %v430, %v129
    %v432 = vadd.f32 %v431, %v130
    %v433 = vmul.f32 %v432, %v338
    %435 = vrot.lane.b32.xlu0 %v432, 64
    %v436 = vpop.permute.xlu0 %435
    %v438 = vmul.f32 %v432, %v436
    %440 = vrot.lane.b32.xlu0 %v438, 32
    %v441 = vpop.permute.xlu0 %440
    %v443 = vadd.f32 %v433, %v441
    %v444 = vtanh.pop %v443
    %446 = vrot.lane.b32.xlu0 %v444, 64
    %v447 = vpop.permute.xlu0 %446
    %v449 = vmul.f32 %v432, %v447
    %451 = vrot.lane.b32.xlu0 %v449, 32
    %v452 = vpop.permute.xlu0 %451
    %v453 = vrot.slane %v116, 3
    %v454 = vrot.slane %v121, 2
    %v455 = vsel %vm138, %v454, %v453
    %v457 = vsel %vm141, %v452, 0
    %459 = vmatprep.subr.mxu0 0.0
    %460 = vmatpush1.msra.mxu0 %v131
    %461 = vmatprep.subr.mxu0 0.0
    %462 = vmatpush1.msra.mxu0 %v132
    %463 = vmatprep.subr.mxu0 0.0
    %464 = vmatpush1.msra.mxu0 %v133
    %465 = vmatprep.subr.mxu0 0.0
    %466 = vmatpush1.msra.mxu0 %v134
    %467 = vmatprep.subr.mxu0 0.0
    %468 = vmatpush1.msra.mxu0 0.0
    %469 = vmatprep.subr.mxu0 0.0
    %470 = vmatpush1.msra.mxu0 0.0
    %471 = vmatprep.subr.mxu0 0.0
    %472 = vmatpush1.msra.mxu0 0.0
    %473 = vmatprep.subr.mxu0 0.0
    %474 = vmatpush1.msra.mxu0 0.0
    %475 = vmatprep.subr.mxu0 0.0
    %476 = vmatpush1.msra.mxu0 0.0
    %477 = vmatprep.subr.mxu0 0.0
    %478 = vmatpush1.msra.mxu0 0.0
    %479 = vmatprep.subr.mxu0 0.0
    %480 = vmatpush1.msra.mxu0 0.0
    %481 = vmatprep.subr.mxu0 0.0
    %482 = vmatpush1.msra.mxu0 0.0
    %483 = vmatprep.subr.mxu0 0.0
    %484 = vmatpush1.msra.mxu0 0.0
    %485 = vmatprep.subr.mxu0 0.0
    %486 = vmatpush1.msra.mxu0 0.0
    %487 = vmatprep.subr.mxu0 0.0
    %488 = vmatpush1.msra.mxu0 0.0
    %489 = vmatprep.subr.mxu0 0.0
    %490 = vmatpush1.msra.mxu0 0.0
    %491 = vmatprep.subr.mxu0 0.0
    %492 = vmatpush1.msra.mxu0 0.0
    %493 = vmatprep.subr.mxu0 0.0
    %494 = vmatpush1.msra.mxu0 0.0
    %495 = vmatprep.subr.mxu0 0.0
    %496 = vmatpush1.msra.mxu0 0.0
    %497 = vmatprep.subr.mxu0 0.0
    %498 = vmatpush1.msra.mxu0 0.0
    %499 = vmatprep.subr.mxu0 0.0
    %500 = vmatpush1.msra.mxu0 0.0
    %501 = vmatprep.subr.mxu0 0.0
    %502 = vmatpush1.msra.mxu0 0.0
    %503 = vmatprep.subr.mxu0 0.0
    %504 = vmatpush1.msra.mxu0 0.0
    %505 = vmatprep.subr.mxu0 0.0
    %506 = vmatpush1.msra.mxu0 0.0
    %507 = vmatprep.subr.mxu0 0.0
    %508 = vmatpush1.msra.mxu0 0.0
    %509 = vmatprep.subr.mxu0 0.0
    %510 = vmatpush1.msra.mxu0 0.0
    %511 = vmatprep.subr.mxu0 0.0
    %512 = vmatpush1.msra.mxu0 0.0
    %513 = vmatprep.subr.mxu0 0.0
    %514 = vmatpush1.msra.mxu0 0.0
    %515 = vmatprep.subr.mxu0 0.0
    %516 = vmatpush1.msra.mxu0 0.0
    %517 = vmatprep.subr.mxu0 0.0
    %518 = vmatpush1.msra.mxu0 0.0
    %519 = vmatprep.subr.mxu0 0.0
    %520 = vmatpush1.msra.mxu0 0.0
    %521 = vmatprep.subr.mxu0 0.0
    %522 = vmatpush1.msra.mxu0 0.0
    %523 = vmatprep.mubr.f32.mxu0 0.0
    %524 = vmatmul.mubr.f32.gmra.mrb[0].mxu0 %v457
    %v525 = vpop.f32.mrb[0].mxu0
    %v526 = vadd.f32 %v455, %v525
    %v527 = vpop.f32.mrb[0].mxu0
    %528 = vdwg.mxu0
    %v529 = vmul.f32 %v526, %v129
    %v530 = vxor.u32 %v529, 2147483648
    %v531 = vmul.f32 %v530, 1.442695
    %v532 = vpow.pop %v531
    %v533 = vadd.f32 %v532, 1.0
    %v534 = vrcp.pop %v533
    %v535 = vmul.f32 1.0, %v534
    %v536 = vmul.f32 %v535, %v129
    %v537 = vadd.f32 %v536, %v130
    %v538 = vmul.f32 %v537, %v443
    %540 = vrot.lane.b32.xlu0 %v537, 64
    %v541 = vpop.permute.xlu0 %540
    %v543 = vmul.f32 %v537, %v541
    %545 = vrot.lane.b32.xlu0 %v543, 32
    %v546 = vpop.permute.xlu0 %545
    %v548 = vadd.f32 %v538, %v546
    %v549 = vtanh.pop %v548
    %551 = vrot.lane.b32.xlu0 %v549, 64
    %v552 = vpop.permute.xlu0 %551
    %v554 = vmul.f32 %v537, %v552
    %556 = vrot.lane.b32.xlu0 %v554, 32
    %v557 = vpop.permute.xlu0 %556
    %v558 = vrot.slane %v116, 4
    %v559 = vrot.slane %v121, 3
    %v560 = vsel %vm138, %v559, %v558
    %v562 = vsel %vm141, %v557, 0
    %564 = vmatprep.subr.mxu0 0.0
    %565 = vmatpush1.msra.mxu0 %v131
    %566 = vmatprep.subr.mxu0 0.0
    %567 = vmatpush1.msra.mxu0 %v132
    %568 = vmatprep.subr.mxu0 0.0
    %569 = vmatpush1.msra.mxu0 %v133
    %570 = vmatprep.subr.mxu0 0.0
    %571 = vmatpush1.msra.mxu0 %v134
    %572 = vmatprep.subr.mxu0 0.0
    %573 = vmatpush1.msra.mxu0 0.0
    %574 = vmatprep.subr.mxu0 0.0
    %575 = vmatpush1.msra.mxu0 0.0
    %576 = vmatprep.subr.mxu0 0.0
    %577 = vmatpush1.msra.mxu0 0.0
    %578 = vmatprep.subr.mxu0 0.0
    %579 = vmatpush1.msra.mxu0 0.0
    %580 = vmatprep.subr.mxu0 0.0
    %581 = vmatpush1.msra.mxu0 0.0
    %582 = vmatprep.subr.mxu0 0.0
    %583 = vmatpush1.msra.mxu0 0.0
    %584 = vmatprep.subr.mxu0 0.0
    %585 = vmatpush1.msra.mxu0 0.0
    %586 = vmatprep.subr.mxu0 0.0
    %587 = vmatpush1.msra.mxu0 0.0
    %588 = vmatprep.subr.mxu0 0.0
    %589 = vmatpush1.msra.mxu0 0.0
    %590 = vmatprep.subr.mxu0 0.0
    %591 = vmatpush1.msra.mxu0 0.0
    %592 = vmatprep.subr.mxu0 0.0
    %593 = vmatpush1.msra.mxu0 0.0
    %594 = vmatprep.subr.mxu0 0.0
    %595 = vmatpush1.msra.mxu0 0.0
    %596 = vmatprep.subr.mxu0 0.0
    %597 = vmatpush1.msra.mxu0 0.0
    %598 = vmatprep.subr.mxu0 0.0
    %599 = vmatpush1.msra.mxu0 0.0
    %600 = vmatprep.subr.mxu0 0.0
    %601 = vmatpush1.msra.mxu0 0.0
    %602 = vmatprep.subr.mxu0 0.0
    %603 = vmatpush1.msra.mxu0 0.0
    %604 = vmatprep.subr.mxu0 0.0
    %605 = vmatpush1.msra.mxu0 0.0
    %606 = vmatprep.subr.mxu0 0.0
    %607 = vmatpush1.msra.mxu0 0.0
    %608 = vmatprep.subr.mxu0 0.0
    %609 = vmatpush1.msra.mxu0 0.0
    %610 = vmatprep.subr.mxu0 0.0
    %611 = vmatpush1.msra.mxu0 0.0
    %612 = vmatprep.subr.mxu0 0.0
    %613 = vmatpush1.msra.mxu0 0.0
    %614 = vmatprep.subr.mxu0 0.0
    %615 = vmatpush1.msra.mxu0 0.0
    %616 = vmatprep.subr.mxu0 0.0
    %617 = vmatpush1.msra.mxu0 0.0
    %618 = vmatprep.subr.mxu0 0.0
    %619 = vmatpush1.msra.mxu0 0.0
    %620 = vmatprep.subr.mxu0 0.0
    %621 = vmatpush1.msra.mxu0 0.0
    %622 = vmatprep.subr.mxu0 0.0
    %623 = vmatpush1.msra.mxu0 0.0
    %624 = vmatprep.subr.mxu0 0.0
    %625 = vmatpush1.msra.mxu0 0.0
    %626 = vmatprep.subr.mxu0 0.0
    %627 = vmatpush1.msra.mxu0 0.0
    %628 = vmatprep.mubr.f32.mxu0 0.0
    %629 = vmatmul.mubr.f32.gmra.mrb[0].mxu0 %v562
    %v630 = vpop.f32.mrb[0].mxu0
    %v631 = vadd.f32 %v560, %v630
    %v632 = vpop.f32.mrb[0].mxu0
    %633 = vdwg.mxu0
    %v634 = vmul.f32 %v631, %v129
    %v635 = vxor.u32 %v634, 2147483648
    %v636 = vmul.f32 %v635, 1.442695
    %v637 = vpow.pop %v636
    %v638 = vadd.f32 %v637, 1.0
    %v639 = vrcp.pop %v638
    %v640 = vmul.f32 1.0, %v639
    %v641 = vmul.f32 %v640, %v129
    %v642 = vadd.f32 %v641, %v130
    %v643 = vmul.f32 %v642, %v548
    %645 = vrot.lane.b32.xlu0 %v642, 64
    %v646 = vpop.permute.xlu0 %645
    %v648 = vmul.f32 %v642, %v646
    %650 = vrot.lane.b32.xlu0 %v648, 32
    %v651 = vpop.permute.xlu0 %650
    %v653 = vadd.f32 %v643, %v651
    %v654 = vtanh.pop %v653
    %656 = vrot.lane.b32.xlu0 %v654, 64
    %v657 = vpop.permute.xlu0 %656
    %v659 = vmul.f32 %v642, %v657
    %661 = vrot.lane.b32.xlu0 %v659, 32
    %v662 = vpop.permute.xlu0 %661
    %v663 = vrot.slane %v116, 5
    %v664 = vrot.slane %v121, 4
    %v665 = vsel %vm138, %v664, %v663
    %v667 = vsel %vm141, %v662, 0
    %669 = vmatprep.subr.mxu0 0.0
    %670 = vmatpush1.msra.mxu0 %v131
    %671 = vmatprep.subr.mxu0 0.0
    %672 = vmatpush1.msra.mxu0 %v132
    %673 = vmatprep.subr.mxu0 0.0
    %674 = vmatpush1.msra.mxu0 %v133
    %675 = vmatprep.subr.mxu0 0.0
    %676 = vmatpush1.msra.mxu0 %v134
    %677 = vmatprep.subr.mxu0 0.0
    %678 = vmatpush1.msra.mxu0 0.0
    %679 = vmatprep.subr.mxu0 0.0
    %680 = vmatpush1.msra.mxu0 0.0
    %681 = vmatprep.subr.mxu0 0.0
    %682 = vmatpush1.msra.mxu0 0.0
    %683 = vmatprep.subr.mxu0 0.0
    %684 = vmatpush1.msra.mxu0 0.0
    %685 = vmatprep.subr.mxu0 0.0
    %686 = vmatpush1.msra.mxu0 0.0
    %687 = vmatprep.subr.mxu0 0.0
    %688 = vmatpush1.msra.mxu0 0.0
    %689 = vmatprep.subr.mxu0 0.0
    %690 = vmatpush1.msra.mxu0 0.0
    %691 = vmatprep.subr.mxu0 0.0
    %692 = vmatpush1.msra.mxu0 0.0
    %693 = vmatprep.subr.mxu0 0.0
    %694 = vmatpush1.msra.mxu0 0.0
    %695 = vmatprep.subr.mxu0 0.0
    %696 = vmatpush1.msra.mxu0 0.0
    %697 = vmatprep.subr.mxu0 0.0
    %698 = vmatpush1.msra.mxu0 0.0
    %699 = vmatprep.subr.mxu0 0.0
    %700 = vmatpush1.msra.mxu0 0.0
    %701 = vmatprep.subr.mxu0 0.0
    %702 = vmatpush1.msra.mxu0 0.0
    %703 = vmatprep.subr.mxu0 0.0
    %704 = vmatpush1.msra.mxu0 0.0
    %705 = vmatprep.subr.mxu0 0.0
    %706 = vmatpush1.msra.mxu0 0.0
    %707 = vmatprep.subr.mxu0 0.0
    %708 = vmatpush1.msra.mxu0 0.0
    %709 = vmatprep.subr.mxu0 0.0
    %710 = vmatpush1.msra.mxu0 0.0
    %711 = vmatprep.subr.mxu0 0.0
    %712 = vmatpush1.msra.mxu0 0.0
    %713 = vmatprep.subr.mxu0 0.0
    %714 = vmatpush1.msra.mxu0 0.0
    %715 = vmatprep.subr.mxu0 0.0
    %716 = vmatpush1.msra.mxu0 0.0
    %717 = vmatprep.subr.mxu0 0.0
    %718 = vmatpush1.msra.mxu0 0.0
    %719 = vmatprep.subr.mxu0 0.0
    %720 = vmatpush1.msra.mxu0 0.0
    %721 = vmatprep.subr.mxu0 0.0
    %722 = vmatpush1.msra.mxu0 0.0
    %723 = vmatprep.subr.mxu0 0.0
    %724 = vmatpush1.msra.mxu0 0.0
    %725 = vmatprep.subr.mxu0 0.0
    %726 = vmatpush1.msra.mxu0 0.0
    %727 = vmatprep.subr.mxu0 0.0
    %728 = vmatpush1.msra.mxu0 0.0
    %729 = vmatprep.subr.mxu0 0.0
    %730 = vmatpush1.msra.mxu0 0.0
    %731 = vmatprep.subr.mxu0 0.0
    %732 = vmatpush1.msra.mxu0 0.0
    %733 = vmatprep.mubr.f32.mxu0 0.0
    %734 = vmatmul.mubr.f32.gmra.mrb[0].mxu0 %v667
    %v735 = vpop.f32.mrb[0].mxu0
    %v736 = vadd.f32 %v665, %v735
    %v737 = vpop.f32.mrb[0].mxu0
    %738 = vdwg.mxu0
    %v739 = vmul.f32 %v736, %v129
    %v740 = vxor.u32 %v739, 2147483648
    %v741 = vmul.f32 %v740, 1.442695
    %v742 = vpow.pop %v741
    %v743 = vadd.f32 %v742, 1.0
    %v744 = vrcp.pop %v743
    %v745 = vmul.f32 1.0, %v744
    %v746 = vmul.f32 %v745, %v129
    %v747 = vadd.f32 %v746, %v130
    %v748 = vmul.f32 %v747, %v653
    %750 = vrot.lane.b32.xlu0 %v747, 64
    %v751 = vpop.permute.xlu0 %750
    %v753 = vmul.f32 %v747, %v751
    %755 = vrot.lane.b32.xlu0 %v753, 32
    %v756 = vpop.permute.xlu0 %755
    %v758 = vadd.f32 %v748, %v756
    %v759 = vtanh.pop %v758
    %761 = vrot.lane.b32.xlu0 %v759, 64
    %v762 = vpop.permute.xlu0 %761
    %v764 = vmul.f32 %v747, %v762
    %766 = vrot.lane.b32.xlu0 %v764, 32
    %v767 = vpop.permute.xlu0 %766
    %v768 = vrot.slane %v116, 6
    %v769 = vrot.slane %v121, 5
    %v770 = vsel %vm138, %v769, %v768
    %v772 = vsel %vm141, %v767, 0
    %774 = vmatprep.subr.mxu0 0.0
    %775 = vmatpush1.msra.mxu0 %v131
    %776 = vmatprep.subr.mxu0 0.0
    %777 = vmatpush1.msra.mxu0 %v132
    %778 = vmatprep.subr.mxu0 0.0
    %779 = vmatpush1.msra.mxu0 %v133
    %780 = vmatprep.subr.mxu0 0.0
    %781 = vmatpush1.msra.mxu0 %v134
    %782 = vmatprep.subr.mxu0 0.0
    %783 = vmatpush1.msra.mxu0 0.0
    %784 = vmatprep.subr.mxu0 0.0
    %785 = vmatpush1.msra.mxu0 0.0
    %786 = vmatprep.subr.mxu0 0.0
    %787 = vmatpush1.msra.mxu0 0.0
    %788 = vmatprep.subr.mxu0 0.0
    %789 = vmatpush1.msra.mxu0 0.0
    %790 = vmatprep.subr.mxu0 0.0
    %791 = vmatpush1.msra.mxu0 0.0
    %792 = vmatprep.subr.mxu0 0.0
    %793 = vmatpush1.msra.mxu0 0.0
    %794 = vmatprep.subr.mxu0 0.0
    %795 = vmatpush1.msra.mxu0 0.0
    %796 = vmatprep.subr.mxu0 0.0
    %797 = vmatpush1.msra.mxu0 0.0
    %798 = vmatprep.subr.mxu0 0.0
    %799 = vmatpush1.msra.mxu0 0.0
    %800 = vmatprep.subr.mxu0 0.0
    %801 = vmatpush1.msra.mxu0 0.0
    %802 = vmatprep.subr.mxu0 0.0
    %803 = vmatpush1.msra.mxu0 0.0
    %804 = vmatprep.subr.mxu0 0.0
    %805 = vmatpush1.msra.mxu0 0.0
    %806 = vmatprep.subr.mxu0 0.0
    %807 = vmatpush1.msra.mxu0 0.0
    %808 = vmatprep.subr.mxu0 0.0
    %809 = vmatpush1.msra.mxu0 0.0
    %810 = vmatprep.subr.mxu0 0.0
    %811 = vmatpush1.msra.mxu0 0.0
    %812 = vmatprep.subr.mxu0 0.0
    %813 = vmatpush1.msra.mxu0 0.0
    %814 = vmatprep.subr.mxu0 0.0
    %815 = vmatpush1.msra.mxu0 0.0
    %816 = vmatprep.subr.mxu0 0.0
    %817 = vmatpush1.msra.mxu0 0.0
    %818 = vmatprep.subr.mxu0 0.0
    %819 = vmatpush1.msra.mxu0 0.0
    %820 = vmatprep.subr.mxu0 0.0
    %821 = vmatpush1.msra.mxu0 0.0
    %822 = vmatprep.subr.mxu0 0.0
    %823 = vmatpush1.msra.mxu0 0.0
    %824 = vmatprep.subr.mxu0 0.0
    %825 = vmatpush1.msra.mxu0 0.0
    %826 = vmatprep.subr.mxu0 0.0
    %827 = vmatpush1.msra.mxu0 0.0
    %828 = vmatprep.subr.mxu0 0.0
    %829 = vmatpush1.msra.mxu0 0.0
    %830 = vmatprep.subr.mxu0 0.0
    %831 = vmatpush1.msra.mxu0 0.0
    %832 = vmatprep.subr.mxu0 0.0
    %833 = vmatpush1.msra.mxu0 0.0
    %834 = vmatprep.subr.mxu0 0.0
    %835 = vmatpush1.msra.mxu0 0.0
    %836 = vmatprep.subr.mxu0 0.0
    %837 = vmatpush1.msra.mxu0 0.0
    %838 = vmatprep.mubr.f32.mxu0 0.0
    %839 = vmatmul.mubr.f32.gmra.mrb[0].mxu0 %v772
    %v840 = vpop.f32.mrb[0].mxu0
    %v841 = vadd.f32 %v770, %v840
    %v842 = vpop.f32.mrb[0].mxu0
    %843 = vdwg.mxu0
    %v844 = vmul.f32 %v841, %v129
    %v845 = vxor.u32 %v844, 2147483648
    %v846 = vmul.f32 %v845, 1.442695
    %v847 = vpow.pop %v846
    %v848 = vadd.f32 %v847, 1.0
    %v849 = vrcp.pop %v848
    %v850 = vmul.f32 1.0, %v849
    %v851 = vmul.f32 %v850, %v129
    %v852 = vadd.f32 %v851, %v130
    %v853 = vmul.f32 %v852, %v758
    %855 = vrot.lane.b32.xlu0 %v852, 64
    %v856 = vpop.permute.xlu0 %855
    %v858 = vmul.f32 %v852, %v856
    %860 = vrot.lane.b32.xlu0 %v858, 32
    %v861 = vpop.permute.xlu0 %860
    %v863 = vadd.f32 %v853, %v861
    %v864 = vtanh.pop %v863
    %866 = vrot.lane.b32.xlu0 %v864, 64
    %v867 = vpop.permute.xlu0 %866
    %v869 = vmul.f32 %v852, %v867
    %871 = vrot.lane.b32.xlu0 %v869, 32
    %v872 = vpop.permute.xlu0 %871
    %v873 = vrot.slane %v116, 7
    %v874 = vrot.slane %v121, 6
    %v875 = vsel %vm138, %v874, %v873
    %v877 = vsel %vm141, %v872, 0
    %879 = vmatprep.subr.mxu0 0.0
    %880 = vmatpush1.msra.mxu0 %v131
    %881 = vmatprep.subr.mxu0 0.0
    %882 = vmatpush1.msra.mxu0 %v132
    %883 = vmatprep.subr.mxu0 0.0
    %884 = vmatpush1.msra.mxu0 %v133
    %885 = vmatprep.subr.mxu0 0.0
    %886 = vmatpush1.msra.mxu0 %v134
    %887 = vmatprep.subr.mxu0 0.0
    %888 = vmatpush1.msra.mxu0 0.0
    %889 = vmatprep.subr.mxu0 0.0
    %890 = vmatpush1.msra.mxu0 0.0
    %891 = vmatprep.subr.mxu0 0.0
    %892 = vmatpush1.msra.mxu0 0.0
    %893 = vmatprep.subr.mxu0 0.0
    %894 = vmatpush1.msra.mxu0 0.0
    %895 = vmatprep.subr.mxu0 0.0
    %896 = vmatpush1.msra.mxu0 0.0
    %897 = vmatprep.subr.mxu0 0.0
    %898 = vmatpush1.msra.mxu0 0.0
    %899 = vmatprep.subr.mxu0 0.0
    %900 = vmatpush1.msra.mxu0 0.0
    %901 = vmatprep.subr.mxu0 0.0
    %902 = vmatpush1.msra.mxu0 0.0
    %903 = vmatprep.subr.mxu0 0.0
    %904 = vmatpush1.msra.mxu0 0.0
    %905 = vmatprep.subr.mxu0 0.0
    %906 = vmatpush1.msra.mxu0 0.0
    %907 = vmatprep.subr.mxu0 0.0
    %908 = vmatpush1.msra.mxu0 0.0
    %909 = vmatprep.subr.mxu0 0.0
    %910 = vmatpush1.msra.mxu0 0.0
    %911 = vmatprep.subr.mxu0 0.0
    %912 = vmatpush1.msra.mxu0 0.0
    %913 = vmatprep.subr.mxu0 0.0
    %914 = vmatpush1.msra.mxu0 0.0
    %915 = vmatprep.subr.mxu0 0.0
    %916 = vmatpush1.msra.mxu0 0.0
    %917 = vmatprep.subr.mxu0 0.0
    %918 = vmatpush1.msra.mxu0 0.0
    %919 = vmatprep.subr.mxu0 0.0
    %920 = vmatpush1.msra.mxu0 0.0
    %921 = vmatprep.subr.mxu0 0.0
    %922 = vmatpush1.msra.mxu0 0.0
    %923 = vmatprep.subr.mxu0 0.0
    %924 = vmatpush1.msra.mxu0 0.0
    %925 = vmatprep.subr.mxu0 0.0
    %926 = vmatpush1.msra.mxu0 0.0
    %927 = vmatprep.subr.mxu0 0.0
    %928 = vmatpush1.msra.mxu0 0.0
    %929 = vmatprep.subr.mxu0 0.0
    %930 = vmatpush1.msra.mxu0 0.0
    %931 = vmatprep.subr.mxu0 0.0
    %932 = vmatpush1.msra.mxu0 0.0
    %933 = vmatprep.subr.mxu0 0.0
    %934 = vmatpush1.msra.mxu0 0.0
    %935 = vmatprep.subr.mxu0 0.0
    %936 = vmatpush1.msra.mxu0 0.0
    %937 = vmatprep.subr.mxu0 0.0
    %938 = vmatpush1.msra.mxu0 0.0
    %939 = vmatprep.subr.mxu0 0.0
    %940 = vmatpush1.msra.mxu0 0.0
    %941 = vmatprep.subr.mxu0 0.0
    %942 = vmatpush1.msra.mxu0 0.0
    %943 = vmatprep.mubr.f32.mxu0 0.0
    %944 = vmatmul.mubr.f32.gmra.mrb[0].mxu0 %v877
    %v945 = vpop.f32.mrb[0].mxu0
    %v946 = vadd.f32 %v875, %v945
    %v947 = vpop.f32.mrb[0].mxu0
    %948 = vdwg.mxu0
    %v949 = vmul.f32 %v946, %v129
    %v950 = vxor.u32 %v949, 2147483648
    %v951 = vmul.f32 %v950, 1.442695
    %v952 = vpow.pop %v951
    %v953 = vadd.f32 %v952, 1.0
    %v954 = vrcp.pop %v953
    %v955 = vmul.f32 1.0, %v954
    %v956 = vmul.f32 %v955, %v129
    %v957 = vadd.f32 %v956, %v130
    %v958 = vmul.f32 %v957, %v863
    %960 = vrot.lane.b32.xlu0 %v957, 64
    %v961 = vpop.permute.xlu0 %960
    %v963 = vmul.f32 %v957, %v961
    %965 = vrot.lane.b32.xlu0 %v963, 32
    %v966 = vpop.permute.xlu0 %965
    %v968 = vadd.f32 %v958, %v966
    %v969 = vtanh.pop %v968
    %971 = vrot.lane.b32.xlu0 %v969, 64
    %v972 = vpop.permute.xlu0 %971
    %v974 = vmul.f32 %v957, %v972
    %v975 = vld [vmem:[%s4] sm:$0xff]
    %v976 = vld [vmem:[%s4 + $0x8] sm:$0xff]
    %v977 = vld [vmem:[%s4 + $0x10] sm:$0xff]
    %v978 = vld [vmem:[%s4 + $0x18] sm:$0xff]
    %v979 = vld [vmem:[%s5] sm:$0x1]
    %v981 = vlaneseq
    %v982 = vshrl.u32 %v981, 7
    %v983 = vsub.s32 0, %v982
    %v984 = vrot.slane %v979, %v983
    %987 = vrot.lane.b32.xlu0 %v974, 32
    %v988 = vpop.permute.xlu0 %987
    %v989 = vsel %vm141, %v988, 0
    %991 = vmatprep.subr.mxu0 0.0
    %992 = vmatpush1.msra.mxu0 %v975
    %993 = vmatprep.subr.mxu0 0.0
    %994 = vmatpush1.msra.mxu0 %v976
    %995 = vmatprep.subr.mxu0 0.0
    %996 = vmatpush1.msra.mxu0 %v977
    %997 = vmatprep.subr.mxu0 0.0
    %998 = vmatpush1.msra.mxu0 %v978
    %999 = vmatprep.subr.mxu0 0.0
    %1000 = vmatpush1.msra.mxu0 0.0
    %1001 = vmatprep.subr.mxu0 0.0
    %1002 = vmatpush1.msra.mxu0 0.0
    %1003 = vmatprep.subr.mxu0 0.0
    %1004 = vmatpush1.msra.mxu0 0.0
    %1005 = vmatprep.subr.mxu0 0.0
    %1006 = vmatpush1.msra.mxu0 0.0
    %1007 = vmatprep.subr.mxu0 0.0
    %1008 = vmatpush1.msra.mxu0 0.0
    %1009 = vmatprep.subr.mxu0 0.0
    %1010 = vmatpush1.msra.mxu0 0.0
    %1011 = vmatprep.subr.mxu0 0.0
    %1012 = vmatpush1.msra.mxu0 0.0
    %1013 = vmatprep.subr.mxu0 0.0
    %1014 = vmatpush1.msra.mxu0 0.0
    %1015 = vmatprep.subr.mxu0 0.0
    %1016 = vmatpush1.msra.mxu0 0.0
    %1017 = vmatprep.subr.mxu0 0.0
    %1018 = vmatpush1.msra.mxu0 0.0
    %1019 = vmatprep.subr.mxu0 0.0
    %1020 = vmatpush1.msra.mxu0 0.0
    %1021 = vmatprep.subr.mxu0 0.0
    %1022 = vmatpush1.msra.mxu0 0.0
    %1023 = vmatprep.subr.mxu0 0.0
    %1024 = vmatpush1.msra.mxu0 0.0
    %1025 = vmatprep.subr.mxu0 0.0
    %1026 = vmatpush1.msra.mxu0 0.0
    %1027 = vmatprep.subr.mxu0 0.0
    %1028 = vmatpush1.msra.mxu0 0.0
    %1029 = vmatprep.subr.mxu0 0.0
    %1030 = vmatpush1.msra.mxu0 0.0
    %1031 = vmatprep.subr.mxu0 0.0
    %1032 = vmatpush1.msra.mxu0 0.0
    %1033 = vmatprep.subr.mxu0 0.0
    %1034 = vmatpush1.msra.mxu0 0.0
    %1035 = vmatprep.subr.mxu0 0.0
    %1036 = vmatpush1.msra.mxu0 0.0
    %1037 = vmatprep.subr.mxu0 0.0
    %1038 = vmatpush1.msra.mxu0 0.0
    %1039 = vmatprep.subr.mxu0 0.0
    %1040 = vmatpush1.msra.mxu0 0.0
    %1041 = vmatprep.subr.mxu0 0.0
    %1042 = vmatpush1.msra.mxu0 0.0
    %1043 = vmatprep.subr.mxu0 0.0
    %1044 = vmatpush1.msra.mxu0 0.0
    %1045 = vmatprep.subr.mxu0 0.0
    %1046 = vmatpush1.msra.mxu0 0.0
    %1047 = vmatprep.subr.mxu0 0.0
    %1048 = vmatpush1.msra.mxu0 0.0
    %1049 = vmatprep.subr.mxu0 0.0
    %1050 = vmatpush1.msra.mxu0 0.0
    %1051 = vmatprep.subr.mxu0 0.0
    %1052 = vmatpush1.msra.mxu0 0.0
    %1053 = vmatprep.subr.mxu0 0.0
    %1054 = vmatpush1.msra.mxu0 0.0
    %1055 = vmatprep.mubr.f32.mxu0 0.0
    %1056 = vmatmul.mubr.f32.gmra.mrb[0].mxu0 %v989
    %v1057 = vpop.f32.mrb[0].mxu0
    %v1058 = vadd.f32 %v984, %v1057
    %v1059 = vpop.f32.mrb[0].mxu0
    %1060 = vdwg.mxu0
    %v1061 = vtanh.pop %v1058
    %vm1062 = vcmask 25600
    %1063 = vst.msk [vmem:[#allocation2] sm:$0x3] %vm1062, %v1061
    %vm1065 = vcmask 254976
    %1066 = vst.msk [vmem:[#allocation4] sm:$0x3] %vm1065, %v988
    %1068 = vrot.lane.b32.xlu0 %v968, 96
    %v1069 = vpop.permute.xlu0 %1068
    %1071 = vst.msk [vmem:[#allocation6] sm:$0x3] %vm1065, %v1069
    // Predicated region
    $region26: #{customized_network_forward.1} parent=1 // pred_check
      _
    $region27: #{customized_network_forward.1} parent=1 // pred_check_branch
      %1073 = sbr.rel (0) target = $region29
    $region28: #{customized_network_forward.1} parent=1 // pred_region
      %s1075 = ssub.s32 32, 32
      %1076 = vsyncadd [#allocation3], %s1075
      %s1078 = sshll.u32 [#allocation2], 4
      %s1079 = int_to_ptr.vmem [resolvable:$true] %s1078
      %1081 = dma.vmem_to_hbm [thread:$0]  %s1079, 32, %s6, [#allocation3]
    $region29: #{customized_network_forward.1} parent=1 // pred_fallthru
      _
    // Predicated region
    $region30: #{customized_network_forward.1} parent=1 // pred_check
      _
    $region31: #{customized_network_forward.1} parent=1 // pred_check_branch
      %1083 = sbr.rel (0) target = $region33
    $region32: #{customized_network_forward.1} parent=1 // pred_region
      %s1085 = ssub.s32 32, 32
      %1086 = vsyncadd [#allocation5], %s1085
      %s1088 = sshll.u32 [#allocation4], 4
      %s1089 = int_to_ptr.vmem [resolvable:$true] %s1088
      %1091 = dma.vmem_to_hbm [thread:$0]  %s1089, 32, %s7, [#allocation5]
    $region33: #{customized_network_forward.1} parent=1 // pred_fallthru
      _
    // Predicated region
    $region34: #{customized_network_forward.1} parent=1 // pred_check
      _
    $region35: #{customized_network_forward.1} parent=1 // pred_check_branch
      %1093 = sbr.rel (0) target = $region37
    $region36: #{customized_network_forward.1} parent=1 // pred_region
      %s1095 = ssub.s32 32, 32
      %1096 = vsyncadd [#allocation5], %s1095
      %s1098 = sshll.u32 [#allocation6], 4
      %s1099 = int_to_ptr.vmem [resolvable:$true] %s1098
      %1101 = dma.vmem_to_hbm [thread:$0]  %s1099, 32, %s8, [#allocation5]
    $region37: #{customized_network_forward.1} parent=1 // pred_fallthru
      _
    // Predicated region
    $region38: #{customized_network_forward.1} parent=1 // pred_check
      _
    $region39: #{customized_network_forward.1} parent=1 // pred_check_branch
      %1103 = sbr.rel (0) target = $region41
    $region40: #{customized_network_forward.1} parent=1 // pred_region
      %1104 = dma.done [#allocation3], 32
    $region41: #{customized_network_forward.1} parent=1 // pred_fallthru
      _
    // Predicated region
    $region42: #{customized_network_forward.1} parent=1 // pred_check
      _
    $region43: #{customized_network_forward.1} parent=1 // pred_check_branch
      %1106 = sbr.rel (0) target = $region45
    $region44: #{customized_network_forward.1} parent=1 // pred_region
      %1107 = dma.done [#allocation5], 32
    $region45: #{customized_network_forward.1} parent=1 // pred_fallthru
      _
    // Predicated region
    $region46: #{customized_network_forward.1} parent=1 // pred_check
      _
    $region47: #{customized_network_forward.1} parent=1 // pred_check_branch
      %1109 = sbr.rel (0) target = $region49
    $region48: #{customized_network_forward.1} parent=1 // pred_region
      %1110 = dma.done [#allocation5], 32
    $region49: #{customized_network_forward.1} parent=1 // pred_fallthru
      _
    %1111 = vsyncpa [#allocation3], 1
    %1112 = vsyncpa [#allocation5], 1

</llo_original>
